<compile_context>
chip_gen: v6e
topology: v6e:2x2x1
jax: 0.10.0
libtpu: 0.0.40
codegen_flags: <defaults>
</compile_context>

<pallas_src>
import functools

import numpy as np
import jax
import jax.numpy as jnp
from jax.experimental import pallas as pl
from jax.experimental.pallas import tpu as pltpu


def _branch_kernel(x_ref, o_ref, acc_ref, *, n_total, n_tile, mask_tokens):
    """x_ref: (bt, Nt, Ct) input block; o_ref: (bt, Ct); acc_ref: (bt, Ct) f32 scratch."""
    k = pl.program_id(2)  # reduction (token) axis, last in the grid

    @pl.when(k == 0)
    def _():
        acc_ref[...] = jnp.zeros_like(acc_ref)

    x = x_ref[...]
    if mask_tokens:
        # Last token block may extend past N; zero the out-of-range token rows so they
        # do not pollute real batch rows of the accumulator.
        tok = k * n_tile + jax.lax.broadcasted_iota(jnp.int32, x.shape, 1)
        x = jnp.where(tok < n_total, x, jnp.zeros_like(x))

    # f32 accumulation regardless of input dtype (input is usually already f32,
    # so no extra upcast intermediate is materialized in that case).
    acc_ref[...] += jnp.sum(x.astype(jnp.float32), axis=1)

    @pl.when(k == pl.num_programs(2) - 1)
    def _():
        # Scale by the true sequence length N, not the per-block token count.
        o_ref[...] = (acc_ref[...] * (1.0 / n_total)).astype(o_ref.dtype)


def _pick_tiles(B, N, C, in_itemsize, budget_bytes=4 << 20):
    """Pick (bt, Nt, Ct) so the per-step input block is ~a few MiB and lane-dense."""
    # Channel tile: full C (lane-dense). If the batch is tiny, split C (still a multiple
    # of 128) so the grid has >= 2 "parallel" steps for v7x's second TensorCore.
    Ct = C
    if B <= 8 and C % 256 == 0:
        Ct = C // 2

    # Batch tile: whole batch if B <= 8 (block == full dim satisfies layout rules),
    # otherwise a multiple of 8; keep >= 2 batch steps once B >= 16 (helps v7x, and the
    # ~0.35 us/step overhead is negligible at MiB-scale blocks), capped by the budget.
    if B <= 8:
        bt = B
    elif B < 16:
        bt = 8
    else:
        bt = 8
        while bt * 2 <= B // 2 and bt * 2 * min(N, 512) * Ct * in_itemsize <= budget_bytes:
            bt *= 2

    # Token tile: whole sequence if it fits the budget, otherwise a multiple of 8 and
    # accumulate across grid steps (reduction axis).
    if bt * N * Ct * in_itemsize <= budget_bytes:
        Nt = N
    else:
        Nt = max(8, (budget_bytes // (bt * Ct * in_itemsize)) // 8 * 8)
        Nt = min(Nt, N)
    return bt, Nt, Ct


def branch_forward(tokens):
    """tokens: (B, N, C) backbone output. Returns (B, C) = mean over the token axis.

    Equivalent to AdaptiveAvgPool1d(1)(tokens.transpose(1, 2)).squeeze(2).
    """
    B, N, C = tokens.shape
    in_itemsize = jnp.dtype(tokens.dtype).itemsize
    bt, Nt, Ct = _pick_tiles(B, N, C, in_itemsize)

    nb = pl.cdiv(B, bt)   # partial last batch block: garbage rows only feed output rows
    nc = pl.cdiv(C, Ct)   # beyond B, which Pallas masks on store (no wrapper pad needed).
    nk = pl.cdiv(N, Nt)
    mask_tokens = (N % Nt) != 0

    kernel = functools.partial(
        _branch_kernel, n_total=N, n_tile=Nt, mask_tokens=mask_tokens
    )

    return pl.pallas_call(
        kernel,
        out_shape=jax.ShapeDtypeStruct((B, C), tokens.dtype),
        grid_spec=pltpu.PrefetchScalarGridSpec(
            num_scalar_prefetch=0,
            grid=(nb, nc, nk),
            in_specs=[pl.BlockSpec((bt, Nt, Ct), lambda i, j, k: (i, k, j))],
            # Lane-dense (bt, Ct) output block, Ct a multiple of 128 (or == C).
            out_specs=pl.BlockSpec((bt, Ct), lambda i, j, k: (i, j)),
            scratch_shapes=[pltpu.VMEM((bt, Ct), jnp.float32)],
        ),
        compiler_params=pltpu.CompilerParams(
            dimension_semantics=("parallel", "parallel", "arbitrary"),
            vmem_limit_bytes=32 << 20,
        ),
    )(tokens)


def ref_forward(tokens):
    """Pure-JAX reference mirroring the PyTorch forward (post-backbone)."""
    return jnp.mean(tokens, axis=1)


if __name__ == "__main__":
    B, N, C = 16, 128, 256  # (batch, tokens, channels) — C lane-dense (multiple of 128)

    key = jax.random.PRNGKey(0)
    # Backbone modeled as identity: this is its (B, N, C) token output.
    tokens = jax.random.normal(key, (B, N, C), jnp.float32)

    out = jax.block_until_ready(branch_forward(tokens))
    ref = jax.block_until_ready(ref_forward(tokens))

    assert out.shape == (B, C), out.shape
    max_err = float(np.max(np.abs(np.asarray(out) - np.asarray(ref))))
    assert np.allclose(np.asarray(out), np.asarray(ref), rtol=1e-5, atol=1e-5), max_err

    print("KERNEL_OK")
</pallas_src>

<mosaic_0001>
module attributes {stable_mosaic.version = 11 : i64} {
  func.func @_branch_kernel(%arg0: i32, %arg1: i32, %arg2: i32, %arg3: memref<8x128x256xf32, #tpu.memory_space<vmem>>, %arg4: memref<8x256xf32, #tpu.memory_space<vmem>>, %arg5: memref<8x256xf32, #tpu.memory_space<vmem>>) attributes {dimension_semantics = [#tpu.dimension_semantics<parallel>, #tpu.dimension_semantics<parallel>, #tpu.dimension_semantics<arbitrary>], iteration_bounds = array<i64: 2, 1, 1>, scalar_prefetch = 0 : i64, scratch_operands = 1 : i64, tpu.core_type = #tpu.core_type<tc>, window_params = [{transform_indices = @transform_0, window_bounds = array<i64: 8, 128, 256>}, {transform_indices = @transform_1, window_bounds = array<i64: 8, 256>}]} {
    %c0_i32 = arith.constant 0 : i32
    %0 = arith.cmpi eq, %arg2, %c0_i32 : i32
    %1 = arith.extui %0 : i1 to i32
    %c0_i32_0 = arith.constant 0 : i32
    %2 = arith.cmpi ne, %1, %c0_i32_0 : i32
    scf.if %2 {
      %cst_9 = arith.constant 0.000000e+00 : f32
      %11 = vector.broadcast %cst_9 : f32 to vector<8x256xf32>
      %c0_10 = arith.constant 0 : index
      %c0_11 = arith.constant 0 : index
      %12 = vector.load %arg5[%c0_10, %c0_11] : memref<8x256xf32, #tpu.memory_space<vmem>>, vector<8x256xf32>
      tpu.vector_store %arg5[%c0_10, %c0_11], %11 {strides = array<i32>} : memref<8x256xf32, #tpu.memory_space<vmem>>, vector<8x256xf32>,
    } else {
    }
    %c0 = arith.constant 0 : index
    %c0_1 = arith.constant 0 : index
    %c0_2 = arith.constant 0 : index
    %3 = vector.load %arg3[%c0, %c0_1, %c0_2] : memref<8x128x256xf32, #tpu.memory_space<vmem>>, vector<8x128x256xf32>
    %c0_3 = arith.constant 0 : index
    %c0_4 = arith.constant 0 : index
    %4 = vector.load %arg5[%c0_3, %c0_4] : memref<8x256xf32, #tpu.memory_space<vmem>>, vector<8x256xf32>
    %cst = arith.constant dense<0.000000e+00> : vector<8x256xf32>
    %5 = vector.multi_reduction <add>, %3, %cst [1] : vector<8x128x256xf32> to vector<8x256xf32>
    %6 = arith.addf %4, %5 : vector<8x256xf32>
    %c0_5 = arith.constant 0 : index
    %c0_6 = arith.constant 0 : index
    %7 = vector.load %arg5[%c0_5, %c0_6] : memref<8x256xf32, #tpu.memory_space<vmem>>, vector<8x256xf32>
    tpu.vector_store %arg5[%c0_5, %c0_6], %6 {strides = array<i32>} : memref<8x256xf32, #tpu.memory_space<vmem>>, vector<8x256xf32>,
    %c0_i32_7 = arith.constant 0 : i32
    %8 = arith.cmpi eq, %arg2, %c0_i32_7 : i32
    %9 = arith.extui %8 : i1 to i32
    %c0_i32_8 = arith.constant 0 : i32
    %10 = arith.cmpi ne, %9, %c0_i32_8 : i32
    scf.if %10 {
      %c0_9 = arith.constant 0 : index
      %c0_10 = arith.constant 0 : index
      %11 = vector.load %arg5[%c0_9, %c0_10] : memref<8x256xf32, #tpu.memory_space<vmem>>, vector<8x256xf32>
      %cst_11 = arith.constant 7.812500e-03 : f32
      %12 = vector.broadcast %cst_11 : f32 to vector<8x256xf32>
      %13 = arith.mulf %11, %12 : vector<8x256xf32>
      %c0_12 = arith.constant 0 : index
      %c0_13 = arith.constant 0 : index
      %14 = vector.load %arg4[%c0_12, %c0_13] : memref<8x256xf32, #tpu.memory_space<vmem>>, vector<8x256xf32>
      tpu.vector_store %arg4[%c0_12, %c0_13], %13 {strides = array<i32>} : memref<8x256xf32, #tpu.memory_space<vmem>>, vector<8x256xf32>,
    } else {
    }
    return
  }
  func.func @transform_0(%arg0: i32, %arg1: i32, %arg2: i32) -> (i32, i32, i32) {
    %c0_i32 = arith.constant 0 : i32
    return %arg0, %arg2, %arg1 : i32, i32, i32
  }
  func.func @transform_1(%arg0: i32, %arg1: i32, %arg2: i32) -> (i32, i32) {
    %c0_i32 = arith.constant 0 : i32
    return %arg0, %arg1 : i32, i32
  }
}

</mosaic_0001>

<llo_original>
// kernel: tpu_custom_call.1
$region0: #{tpu_custom_call.1}
  #allocation0 [shape = 'u32[]', space=smem, size = 0x4, offset = 0x4, fixed_abs, tag = 'smem constant byte address 0x4 - core index']
  #allocation1 [shape = 'u32[144,128]{1,0:T(1,128)}', space=vmem, size = 0x12000, scoped, tag = 'internal scratch']
  #allocation2 [shape = 'f32[8,256]{1,0:T(8,128)}', space=vmem, size = 0x2000, scoped, tag = 'scratch operand']
  %s0 = inlined_call_operand.hbm [shape: f32[16,128,256], index: 0, kind: input, shape index: {}]
  %s1 = inlined_call_operand.hbm [shape: f32[16,256], index: 1, kind: output, shape index: {}]
  %s2 = sld [smem:[#allocation0]]
  $region49: #{tpu_custom_call.1} parent=0
    _
  %s4 = ssub.s32 1, %s2
  %s5 = scalar_select 0, %s4, %s2
  $region1: #{tpu_custom_call.1} parent=0
    #allocation3 [shape = 'u8[2097152]{0}', space=vmem, size = 0x200000, scoped, tag = 'input window, operand 0']
    #allocation4 [shape = 's32[2]{0}', space=sflag, size = 0x8, scoped, tag = 'scoped memory for tpu_custom_call.1']
    #allocation5 [shape = 's32[2]{0}', space=sflag, size = 0x8, scoped, tag = 'scoped memory for tpu_custom_call.1']
    #allocation6 [shape = 'u8[16384]{0}', space=vmem, size = 0x4000, scoped, tag = 'output window, operand 0']
    %6 = vsyncpa [#allocation4], 0
    %s7 = scalar_lea.sflag [#allocation4], 1
    %8 = vsyncpa %s7, 0
    %9 = vsyncpa [#allocation5], 0
    %s10 = scalar_lea.sflag [#allocation5], 1
    %11 = vsyncpa %s10, 0
    loop: start=0, step=1, limit=4
    $region2: #{tpu_custom_call.1} parent=1 // loop_pre_header
      _
    $region3: #{tpu_custom_call.1} parent=1 // loop_header
      %s13 = sphi 0, %s17
      %p14 = scmp.ge.s32.totalorder %s13, 4
      %s20 = sphi 0, %s39
      %s21 = sphi 0, %s35
      %s22 = sphi 0, %s31
      %s23 = sphi 0, %s20
      %s24 = sphi 0, %s21
      %s25 = sphi 0, %s22
      %s26 = sphi 0, %s23
      %s27 = sphi 0, %s24
      %s28 = sphi 0, %s25
      %s46 = sphi 0, %s48
      %s49 = sphi 0, %s46
      %s50 = sphi 0, %s49
      %s66 = sphi 0, %s50
      %s74 = sphi 0, %s76
      %s77 = sphi 0, %s74
      %s78 = sphi 0, %s77
      %s94 = sphi 0, %s78
    $region4: #{tpu_custom_call.1} parent=1 // loop_header_branch
      %16 = sbr.rel (%p14) target = $region8
    $region5: #{tpu_custom_call.1} parent=1 // loop_body
      %s18 = ssub.s32 %s13, 1
      %s19 = ssub.s32 %s13, 2
      %s29 = sadd.s32 1, %s22
      %p30 = scmp.ge.s32.totalorder %s29, 1
      %s31 = scalar_select %p30, 0, %s29
      %s32 = sadd.s32 1, %s21
      %s33 = scalar_select %p30, %s32, %s21
      %p34 = scmp.ge.s32.totalorder %s33, 1
      %s35 = scalar_select %p34, 0, %s33
      %s36 = sadd.s32 1, %s20
      %s37 = scalar_select %p34, %s36, %s20
      %p38 = scmp.ge.s32.totalorder %s37, 2
      %s39 = scalar_select %p38, 0, %s37
      %s40 = ssub.s32 %s20, %s39
      %s41 = ssub.s32 %s22, %s31
      %s42 = sor.u32 %s40, %s41
      %s43 = ssub.s32 %s21, %s35
      %s44 = sor.u32 %s42, %s43
      %p45 = scmp.eq.s32.totalorder %s44, 0
      %s47 = sadd.s32 %s46, 1
      %s48 = scalar_select %p45, %s46, %s47
      %p51 = pneg %p45
      %p52 = scmp.eq.s32.totalorder %s13, 1
      %p53 = por %p51, %p52
      %p54 = scmp.ne.s32.totalorder %s46, %s49
      %p55 = scmp.eq.s32.totalorder %s13, 0
      %p56 = por %p54, %p55
      %p57 = scmp.ne.s32.totalorder %s46, %s49
      %p58 = scmp.eq.s32.totalorder %s18, 1
      %p59 = por %p57, %p58
      %p60 = scmp.ne.s32.totalorder %s49, %s50
      %p61 = scmp.eq.s32.totalorder %s18, 0
      %p62 = por %p60, %p61
      %p63 = scmp.ne.s32.totalorder %s49, %s50
      %p64 = scmp.eq.s32.totalorder %s19, 1
      %p65 = por %p63, %p64
      %p67 = scmp.ne.s32.totalorder %s50, %s66
      %p68 = scmp.eq.s32.totalorder %s19, 0
      %p69 = por %p67, %p68
      %s70 = ssub.s32 %s20, %s39
      %s71 = ssub.s32 %s21, %s35
      %s72 = sor.u32 %s70, %s71
      %p73 = scmp.eq.s32.totalorder %s72, 0
      %s75 = sadd.s32 %s74, 1
      %s76 = scalar_select %p73, %s74, %s75
      %p79 = pneg %p73
      %p80 = scmp.eq.s32.totalorder %s13, 1
      %p81 = por %p79, %p80
      %p82 = scmp.ne.s32.totalorder %s74, %s77
      %p83 = scmp.eq.s32.totalorder %s13, 0
      %p84 = por %p82, %p83
      %p85 = scmp.ne.s32.totalorder %s74, %s77
      %p86 = scmp.eq.s32.totalorder %s18, 1
      %p87 = por %p85, %p86
      %p88 = scmp.ne.s32.totalorder %s77, %s78
      %p89 = scmp.eq.s32.totalorder %s18, 0
      %p90 = por %p88, %p89
      %p91 = scmp.ne.s32.totalorder %s77, %s78
      %p92 = scmp.eq.s32.totalorder %s19, 1
      %p93 = por %p91, %p92
      %p95 = scmp.ne.s32.totalorder %s78, %s94
      %p96 = scmp.eq.s32.totalorder %s19, 0
      %p97 = por %p95, %p96
      %p98 = scmp.le.s32.totalorder 1, %s13
      %p99 = scmp.lt.s32.totalorder %s13, 3
      %p100 = pnand %p98, %p99
      %p101 = pneg %p100
      // Predicated region
      $region9: #{tpu_custom_call.1} parent=5 // pred_check
        _
      $region10: #{tpu_custom_call.1} parent=5 // pred_check_branch
        %103 = sbr.rel (%p100) target = $region12
      $region11: #{tpu_custom_call.1} parent=5 // pred_region
        %s104 = ssub.s32 %s13, 1
      $region12: #{tpu_custom_call.1} parent=5 // pred_fallthru
        _
      %p105 = scmp.lt.s32.totalorder %s13, 2
      // Predicated region
      $region13: #{tpu_custom_call.1} parent=5 // pred_check
        %p106 = pneg %p105
      $region14: #{tpu_custom_call.1} parent=5 // pred_check_branch
        %108 = sbr.rel (%p106) target = $region16
      $region15: #{tpu_custom_call.1} parent=5 // pred_region
        // Predicated region
        $region17: #{tpu_custom_call.1} parent=15 // pred_check
          %p109 = pneg %p56
        $region18: #{tpu_custom_call.1} parent=15 // pred_check_branch
          %111 = sbr.rel (%p109) target = $region20
        $region19: #{tpu_custom_call.1} parent=15 // pred_region
          %s112 = sand.u32 %s46, 1
          %s113 = scalar_lea.sflag [#allocation4], %s112
          %s114 = sand.u32 %s46, 1
          %s115 = smul.addr %s114, 2048
          %s116 = scalar_lea.vmem [#allocation3], %s115
          %s117 = smul.u32 8, %s20
          %s118 = smul.u32 16, %s22
          %s119 = smul.u32 2, %s21
          %s121 = ssub.s32 32768, 32768
          %122 = vsyncadd %s113, %s121
          %s123 = smul.addr %s118, 2
          %s124 = sadd.s32 %s119, %s123
          %s125 = smul.addr %s117, 32
          %s126 = sadd.s32 %s124, %s125
          %s127 = smul.addr %s126, 128
          %s128 = scalar_lea.hbm %s0, %s127
          %s129 = sshll.u32 %s116, 4
          %s130 = int_to_ptr.vmem [resolvable:$true] %s129
          %135 = dma.hbm_to_vmem [thread:$0]  %s128, 32768, %s130, %s113, 256, 256, 16
        $region20: #{tpu_custom_call.1} parent=15 // pred_fallthru
          _
      $region16: #{tpu_custom_call.1} parent=5 // pred_fallthru
        _
      %p136 = scmp.le.s32.totalorder 1, %s13
      %p137 = scmp.lt.s32.totalorder %s13, 3
      %p138 = pnand %p136, %p137
      %p139 = pneg %p138
      // Predicated region
      $region21: #{tpu_custom_call.1} parent=5 // pred_check
        _
      $region22: #{tpu_custom_call.1} parent=5 // pred_check_branch
        %141 = sbr.rel (%p138) target = $region24
      $region23: #{tpu_custom_call.1} parent=5 // pred_region
        %s142 = ssub.s32 %s13, 1
        %s143 = sand.u32 %s49, 1
        %s144 = scalar_lea.sflag [#allocation4], %s143
        %s145 = sand.u32 %s49, 1
        %s146 = smul.addr %s145, 2048
        %s147 = scalar_lea.vmem [#allocation3], %s146
        // Predicated region
        $region25: #{tpu_custom_call.1} parent=23 // pred_check
          %p148 = pneg %p62
        $region26: #{tpu_custom_call.1} parent=23 // pred_check_branch
          %150 = sbr.rel (%p148) target = $region28
        $region27: #{tpu_custom_call.1} parent=23 // pred_region
          %151 = dma.done %s144, 32768
        $region28: #{tpu_custom_call.1} parent=23 // pred_fallthru
          _
        %s152 = sand.u32 %s49, 1
        %s153 = scalar_lea.sflag [#allocation4], %s152
        %s154 = sand.u32 %s49, 1
        %s155 = smul.addr %s154, 2048
        %s156 = scalar_lea.vmem [#allocation3], %s155
        %p157 = pneg %p62
        %p158 = pneg %p59
        %p159 = pneg %p90
        %p160 = pneg %p87
        %s161 = sand.u32 %s77, 1
        %s162 = scalar_lea.sflag [#allocation5], %s161
        %s163 = sand.u32 %s77, 1
        %s164 = smul.addr %s163, 16
        %s165 = scalar_lea.vmem [#allocation6], %s164
        %s166 = smul.u32 8, %s23
        %s167 = smul.u32 16, %s25
        %s168 = smul.u32 2, %s24
        %s169 = smul.u32 2, %s24
        %p170 = scmp.eq.s32.totalorder %s25, 0
        // Predicated region
        $region29: #{tpu_custom_call.1} parent=23 // pred_check
          %p171 = pneg %p170
        $region30: #{tpu_custom_call.1} parent=23 // pred_check_branch
          %173 = sbr.rel (%p171) target = $region32
        $region31: #{tpu_custom_call.1} parent=23 // pred_region
          %174 = vst [vmem:[#allocation2] sm:$0xff] 0.0
          %175 = vst [vmem:[#allocation2 + $0x8] sm:$0xff] 0.0
        $region32: #{tpu_custom_call.1} parent=23 // pred_fallthru
          _
        %v176 = vld [vmem:[%s147] sm:$0xff]
        %v177 = vld [vmem:[%s147 + $0x8] sm:$0xff]
        %v178 = vld [vmem:[%s147 + $0x10] sm:$0xff]
        %v179 = vld [vmem:[%s147 + $0x18] sm:$0xff]
        %v180 = vld [vmem:[%s147 + $0x20] sm:$0xff]
        %v181 = vld [vmem:[%s147 + $0x28] sm:$0xff]
        %v182 = vld [vmem:[%s147 + $0x30] sm:$0xff]
        %v183 = vld [vmem:[%s147 + $0x38] sm:$0xff]
        %v184 = vld [vmem:[%s147 + $0x40] sm:$0xff]
        %v185 = vld [vmem:[%s147 + $0x48] sm:$0xff]
        %v186 = vld [vmem:[%s147 + $0x50] sm:$0xff]
        %v187 = vld [vmem:[%s147 + $0x58] sm:$0xff]
        %v188 = vld [vmem:[%s147 + $0x60] sm:$0xff]
        %v189 = vld [vmem:[%s147 + $0x68] sm:$0xff]
        %v190 = vld [vmem:[%s147 + $0x70] sm:$0xff]
        %v191 = vld [vmem:[%s147 + $0x78] sm:$0xff]
        %v192 = vld [vmem:[%s147 + $0x80] sm:$0xff]
        %v193 = vld [vmem:[%s147 + $0x88] sm:$0xff]
        %v194 = vld [vmem:[%s147 + $0x90] sm:$0xff]
        %v195 = vld [vmem:[%s147 + $0x98] sm:$0xff]
        %v196 = vld [vmem:[%s147 + $0xa0] sm:$0xff]
        %v197 = vld [vmem:[%s147 + $0xa8] sm:$0xff]
        %v198 = vld [vmem:[%s147 + $0xb0] sm:$0xff]
        %v199 = vld [vmem:[%s147 + $0xb8] sm:$0xff]
        %v200 = vld [vmem:[%s147 + $0xc0] sm:$0xff]
        %v201 = vld [vmem:[%s147 + $0xc8] sm:$0xff]
        %v202 = vld [vmem:[%s147 + $0xd0] sm:$0xff]
        %v203 = vld [vmem:[%s147 + $0xd8] sm:$0xff]
        %v204 = vld [vmem:[%s147 + $0xe0] sm:$0xff]
        %v205 = vld [vmem:[%s147 + $0xe8] sm:$0xff]
        %v206 = vld [vmem:[%s147 + $0xf0] sm:$0xff]
        %v207 = vld [vmem:[%s147 + $0xf8] sm:$0xff]
        %v208 = vld [vmem:[%s147 + $0x100] sm:$0xff]
        %v209 = vld [vmem:[%s147 + $0x108] sm:$0xff]
        %v210 = vld [vmem:[%s147 + $0x110] sm:$0xff]
        %v211 = vld [vmem:[%s147 + $0x118] sm:$0xff]
        %v212 = vld [vmem:[%s147 + $0x120] sm:$0xff]
        %v213 = vld [vmem:[%s147 + $0x128] sm:$0xff]
        %v214 = vld [vmem:[%s147 + $0x130] sm:$0xff]
        %v215 = vld [vmem:[%s147 + $0x138] sm:$0xff]
        %v216 = vld [vmem:[%s147 + $0x140] sm:$0xff]
        %v217 = vld [vmem:[%s147 + $0x148] sm:$0xff]
        %v218 = vld [vmem:[%s147 + $0x150] sm:$0xff]
        %v219 = vld [vmem:[%s147 + $0x158] sm:$0xff]
        %v220 = vld [vmem:[%s147 + $0x160] sm:$0xff]
        %v221 = vld [vmem:[%s147 + $0x168] sm:$0xff]
        %v222 = vld [vmem:[%s147 + $0x170] sm:$0xff]
        %v223 = vld [vmem:[%s147 + $0x178] sm:$0xff]
        %v224 = vld [vmem:[%s147 + $0x180] sm:$0xff]
        %v225 = vld [vmem:[%s147 + $0x188] sm:$0xff]
        %v226 = vld [vmem:[%s147 + $0x190] sm:$0xff]
        %v227 = vld [vmem:[%s147 + $0x198] sm:$0xff]
        %v228 = vld [vmem:[%s147 + $0x1a0] sm:$0xff]
        %v229 = vld [vmem:[%s147 + $0x1a8] sm:$0xff]
        %v230 = vld [vmem:[%s147 + $0x1b0] sm:$0xff]
        %v231 = vld [vmem:[%s147 + $0x1b8] sm:$0xff]
        %v232 = vld [vmem:[%s147 + $0x1c0] sm:$0xff]
        %v233 = vld [vmem:[%s147 + $0x1c8] sm:$0xff]
        %v234 = vld [vmem:[%s147 + $0x1d0] sm:$0xff]
        %v235 = vld [vmem:[%s147 + $0x1d8] sm:$0xff]
        %v236 = vld [vmem:[%s147 + $0x1e0] sm:$0xff]
        %v237 = vld [vmem:[%s147 + $0x1e8] sm:$0xff]
        %v238 = vld [vmem:[%s147 + $0x1f0] sm:$0xff]
        %v239 = vld [vmem:[%s147 + $0x1f8] sm:$0xff]
        %v240 = vld [vmem:[%s147 + $0x200] sm:$0xff]
        %v241 = vld [vmem:[%s147 + $0x208] sm:$0xff]
        %v242 = vld [vmem:[%s147 + $0x210] sm:$0xff]
        %v243 = vld [vmem:[%s147 + $0x218] sm:$0xff]
        %v244 = vld [vmem:[%s147 + $0x220] sm:$0xff]
        %v245 = vld [vmem:[%s147 + $0x228] sm:$0xff]
        %v246 = vld [vmem:[%s147 + $0x230] sm:$0xff]
        %v247 = vld [vmem:[%s147 + $0x238] sm:$0xff]
        %v248 = vld [vmem:[%s147 + $0x240] sm:$0xff]
        %v249 = vld [vmem:[%s147 + $0x248] sm:$0xff]
        %v250 = vld [vmem:[%s147 + $0x250] sm:$0xff]
        %v251 = vld [vmem:[%s147 + $0x258] sm:$0xff]
        %v252 = vld [vmem:[%s147 + $0x260] sm:$0xff]
        %v253 = vld [vmem:[%s147 + $0x268] sm:$0xff]
        %v254 = vld [vmem:[%s147 + $0x270] sm:$0xff]
        %v255 = vld [vmem:[%s147 + $0x278] sm:$0xff]
        %v256 = vld [vmem:[%s147 + $0x280] sm:$0xff]
        %v257 = vld [vmem:[%s147 + $0x288] sm:$0xff]
        %v258 = vld [vmem:[%s147 + $0x290] sm:$0xff]
        %v259 = vld [vmem:[%s147 + $0x298] sm:$0xff]
        %v260 = vld [vmem:[%s147 + $0x2a0] sm:$0xff]
        %v261 = vld [vmem:[%s147 + $0x2a8] sm:$0xff]
        %v262 = vld [vmem:[%s147 + $0x2b0] sm:$0xff]
        %v263 = vld [vmem:[%s147 + $0x2b8] sm:$0xff]
        %v264 = vld [vmem:[%s147 + $0x2c0] sm:$0xff]
        %v265 = vld [vmem:[%s147 + $0x2c8] sm:$0xff]
        %v266 = vld [vmem:[%s147 + $0x2d0] sm:$0xff]
        %v267 = vld [vmem:[%s147 + $0x2d8] sm:$0xff]
        %v268 = vld [vmem:[%s147 + $0x2e0] sm:$0xff]
        %v269 = vld [vmem:[%s147 + $0x2e8] sm:$0xff]
        %v270 = vld [vmem:[%s147 + $0x2f0] sm:$0xff]
        %v271 = vld [vmem:[%s147 + $0x2f8] sm:$0xff]
        %v272 = vld [vmem:[%s147 + $0x300] sm:$0xff]
        %v273 = vld [vmem:[%s147 + $0x308] sm:$0xff]
        %v274 = vld [vmem:[%s147 + $0x310] sm:$0xff]
        %v275 = vld [vmem:[%s147 + $0x318] sm:$0xff]
        %v276 = vld [vmem:[%s147 + $0x320] sm:$0xff]
        %v277 = vld [vmem:[%s147 + $0x328] sm:$0xff]
        %v278 = vld [vmem:[%s147 + $0x330] sm:$0xff]
        %v279 = vld [vmem:[%s147 + $0x338] sm:$0xff]
        %v280 = vld [vmem:[%s147 + $0x340] sm:$0xff]
        %v281 = vld [vmem:[%s147 + $0x348] sm:$0xff]
        %v282 = vld [vmem:[%s147 + $0x350] sm:$0xff]
        %v283 = vld [vmem:[%s147 + $0x358] sm:$0xff]
        %v284 = vld [vmem:[%s147 + $0x360] sm:$0xff]
        %v285 = vld [vmem:[%s147 + $0x368] sm:$0xff]
        %v286 = vld [vmem:[%s147 + $0x370] sm:$0xff]
        %v287 = vld [vmem:[%s147 + $0x378] sm:$0xff]
        %v288 = vld [vmem:[%s147 + $0x380] sm:$0xff]
        %v289 = vld [vmem:[%s147 + $0x388] sm:$0xff]
        %v290 = vld [vmem:[%s147 + $0x390] sm:$0xff]
        %v291 = vld [vmem:[%s147 + $0x398] sm:$0xff]
        %v292 = vld [vmem:[%s147 + $0x3a0] sm:$0xff]
        %v293 = vld [vmem:[%s147 + $0x3a8] sm:$0xff]
        %v294 = vld [vmem:[%s147 + $0x3b0] sm:$0xff]
        %v295 = vld [vmem:[%s147 + $0x3b8] sm:$0xff]
        %v296 = vld [vmem:[%s147 + $0x3c0] sm:$0xff]
        %v297 = vld [vmem:[%s147 + $0x3c8] sm:$0xff]
        %v298 = vld [vmem:[%s147 + $0x3d0] sm:$0xff]
        %v299 = vld [vmem:[%s147 + $0x3d8] sm:$0xff]
        %v300 = vld [vmem:[%s147 + $0x3e0] sm:$0xff]
        %v301 = vld [vmem:[%s147 + $0x3e8] sm:$0xff]
        %v302 = vld [vmem:[%s147 + $0x3f0] sm:$0xff]
        %v303 = vld [vmem:[%s147 + $0x3f8] sm:$0xff]
        %v304 = vld [vmem:[%s147 + $0x400] sm:$0xff]
        %v305 = vld [vmem:[%s147 + $0x408] sm:$0xff]
        %v306 = vld [vmem:[%s147 + $0x410] sm:$0xff]
        %v307 = vld [vmem:[%s147 + $0x418] sm:$0xff]
        %v308 = vld [vmem:[%s147 + $0x420] sm:$0xff]
        %v309 = vld [vmem:[%s147 + $0x428] sm:$0xff]
        %v310 = vld [vmem:[%s147 + $0x430] sm:$0xff]
        %v311 = vld [vmem:[%s147 + $0x438] sm:$0xff]
        %v312 = vld [vmem:[%s147 + $0x440] sm:$0xff]
        %v313 = vld [vmem:[%s147 + $0x448] sm:$0xff]
        %v314 = vld [vmem:[%s147 + $0x450] sm:$0xff]
        %v315 = vld [vmem:[%s147 + $0x458] sm:$0xff]
        %v316 = vld [vmem:[%s147 + $0x460] sm:$0xff]
        %v317 = vld [vmem:[%s147 + $0x468] sm:$0xff]
        %v318 = vld [vmem:[%s147 + $0x470] sm:$0xff]
        %v319 = vld [vmem:[%s147 + $0x478] sm:$0xff]
        %v320 = vld [vmem:[%s147 + $0x480] sm:$0xff]
        %v321 = vld [vmem:[%s147 + $0x488] sm:$0xff]
        %v322 = vld [vmem:[%s147 + $0x490] sm:$0xff]
        %v323 = vld [vmem:[%s147 + $0x498] sm:$0xff]
        %v324 = vld [vmem:[%s147 + $0x4a0] sm:$0xff]
        %v325 = vld [vmem:[%s147 + $0x4a8] sm:$0xff]
        %v326 = vld [vmem:[%s147 + $0x4b0] sm:$0xff]
        %v327 = vld [vmem:[%s147 + $0x4b8] sm:$0xff]
        %v328 = vld [vmem:[%s147 + $0x4c0] sm:$0xff]
        %v329 = vld [vmem:[%s147 + $0x4c8] sm:$0xff]
        %v330 = vld [vmem:[%s147 + $0x4d0] sm:$0xff]
        %v331 = vld [vmem:[%s147 + $0x4d8] sm:$0xff]
        %v332 = vld [vmem:[%s147 + $0x4e0] sm:$0xff]
        %v333 = vld [vmem:[%s147 + $0x4e8] sm:$0xff]
        %v334 = vld [vmem:[%s147 + $0x4f0] sm:$0xff]
        %v335 = vld [vmem:[%s147 + $0x4f8] sm:$0xff]
        %v336 = vld [vmem:[%s147 + $0x500] sm:$0xff]
        %v337 = vld [vmem:[%s147 + $0x508] sm:$0xff]
        %v338 = vld [vmem:[%s147 + $0x510] sm:$0xff]
        %v339 = vld [vmem:[%s147 + $0x518] sm:$0xff]
        %v340 = vld [vmem:[%s147 + $0x520] sm:$0xff]
        %v341 = vld [vmem:[%s147 + $0x528] sm:$0xff]
        %v342 = vld [vmem:[%s147 + $0x530] sm:$0xff]
        %v343 = vld [vmem:[%s147 + $0x538] sm:$0xff]
        %v344 = vld [vmem:[%s147 + $0x540] sm:$0xff]
        %v345 = vld [vmem:[%s147 + $0x548] sm:$0xff]
        %v346 = vld [vmem:[%s147 + $0x550] sm:$0xff]
        %v347 = vld [vmem:[%s147 + $0x558] sm:$0xff]
        %v348 = vld [vmem:[%s147 + $0x560] sm:$0xff]
        %v349 = vld [vmem:[%s147 + $0x568] sm:$0xff]
        %v350 = vld [vmem:[%s147 + $0x570] sm:$0xff]
        %v351 = vld [vmem:[%s147 + $0x578] sm:$0xff]
        %v352 = vld [vmem:[%s147 + $0x580] sm:$0xff]
        %v353 = vld [vmem:[%s147 + $0x588] sm:$0xff]
        %v354 = vld [vmem:[%s147 + $0x590] sm:$0xff]
        %v355 = vld [vmem:[%s147 + $0x598] sm:$0xff]
        %v356 = vld [vmem:[%s147 + $0x5a0] sm:$0xff]
        %v357 = vld [vmem:[%s147 + $0x5a8] sm:$0xff]
        %v358 = vld [vmem:[%s147 + $0x5b0] sm:$0xff]
        %v359 = vld [vmem:[%s147 + $0x5b8] sm:$0xff]
        %v360 = vld [vmem:[%s147 + $0x5c0] sm:$0xff]
        %v361 = vld [vmem:[%s147 + $0x5c8] sm:$0xff]
        %v362 = vld [vmem:[%s147 + $0x5d0] sm:$0xff]
        %v363 = vld [vmem:[%s147 + $0x5d8] sm:$0xff]
        %v364 = vld [vmem:[%s147 + $0x5e0] sm:$0xff]
        %v365 = vld [vmem:[%s147 + $0x5e8] sm:$0xff]
        %v366 = vld [vmem:[%s147 + $0x5f0] sm:$0xff]
        %v367 = vld [vmem:[%s147 + $0x5f8] sm:$0xff]
        %v368 = vld [vmem:[%s147 + $0x600] sm:$0xff]
        %v369 = vld [vmem:[%s147 + $0x608] sm:$0xff]
        %v370 = vld [vmem:[%s147 + $0x610] sm:$0xff]
        %v371 = vld [vmem:[%s147 + $0x618] sm:$0xff]
        %v372 = vld [vmem:[%s147 + $0x620] sm:$0xff]
        %v373 = vld [vmem:[%s147 + $0x628] sm:$0xff]
        %v374 = vld [vmem:[%s147 + $0x630] sm:$0xff]
        %v375 = vld [vmem:[%s147 + $0x638] sm:$0xff]
        %v376 = vld [vmem:[%s147 + $0x640] sm:$0xff]
        %v377 = vld [vmem:[%s147 + $0x648] sm:$0xff]
        %v378 = vld [vmem:[%s147 + $0x650] sm:$0xff]
        %v379 = vld [vmem:[%s147 + $0x658] sm:$0xff]
        %v380 = vld [vmem:[%s147 + $0x660] sm:$0xff]
        %v381 = vld [vmem:[%s147 + $0x668] sm:$0xff]
        %v382 = vld [vmem:[%s147 + $0x670] sm:$0xff]
        %v383 = vld [vmem:[%s147 + $0x678] sm:$0xff]
        %v384 = vld [vmem:[%s147 + $0x680] sm:$0xff]
        %v385 = vld [vmem:[%s147 + $0x688] sm:$0xff]
        %v386 = vld [vmem:[%s147 + $0x690] sm:$0xff]
        %v387 = vld [vmem:[%s147 + $0x698] sm:$0xff]
        %v388 = vld [vmem:[%s147 + $0x6a0] sm:$0xff]
        %v389 = vld [vmem:[%s147 + $0x6a8] sm:$0xff]
        %v390 = vld [vmem:[%s147 + $0x6b0] sm:$0xff]
        %v391 = vld [vmem:[%s147 + $0x6b8] sm:$0xff]
        %v392 = vld [vmem:[%s147 + $0x6c0] sm:$0xff]
        %v393 = vld [vmem:[%s147 + $0x6c8] sm:$0xff]
        %v394 = vld [vmem:[%s147 + $0x6d0] sm:$0xff]
        %v395 = vld [vmem:[%s147 + $0x6d8] sm:$0xff]
        %v396 = vld [vmem:[%s147 + $0x6e0] sm:$0xff]
        %v397 = vld [vmem:[%s147 + $0x6e8] sm:$0xff]
        %v398 = vld [vmem:[%s147 + $0x6f0] sm:$0xff]
        %v399 = vld [vmem:[%s147 + $0x6f8] sm:$0xff]
        %v400 = vld [vmem:[%s147 + $0x700] sm:$0xff]
        %v401 = vld [vmem:[%s147 + $0x708] sm:$0xff]
        %v402 = vld [vmem:[%s147 + $0x710] sm:$0xff]
        %v403 = vld [vmem:[%s147 + $0x718] sm:$0xff]
        %v404 = vld [vmem:[%s147 + $0x720] sm:$0xff]
        %v405 = vld [vmem:[%s147 + $0x728] sm:$0xff]
        %v406 = vld [vmem:[%s147 + $0x730] sm:$0xff]
        %v407 = vld [vmem:[%s147 + $0x738] sm:$0xff]
        %v408 = vld [vmem:[%s147 + $0x740] sm:$0xff]
        %v409 = vld [vmem:[%s147 + $0x748] sm:$0xff]
        %v410 = vld [vmem:[%s147 + $0x750] sm:$0xff]
        %v411 = vld [vmem:[%s147 + $0x758] sm:$0xff]
        %v412 = vld [vmem:[%s147 + $0x760] sm:$0xff]
        %v413 = vld [vmem:[%s147 + $0x768] sm:$0xff]
        %v414 = vld [vmem:[%s147 + $0x770] sm:$0xff]
        %v415 = vld [vmem:[%s147 + $0x778] sm:$0xff]
        %v416 = vld [vmem:[%s147 + $0x780] sm:$0xff]
        %v417 = vld [vmem:[%s147 + $0x788] sm:$0xff]
        %v418 = vld [vmem:[%s147 + $0x790] sm:$0xff]
        %v419 = vld [vmem:[%s147 + $0x798] sm:$0xff]
        %v420 = vld [vmem:[%s147 + $0x7a0] sm:$0xff]
        %v421 = vld [vmem:[%s147 + $0x7a8] sm:$0xff]
        %v422 = vld [vmem:[%s147 + $0x7b0] sm:$0xff]
        %v423 = vld [vmem:[%s147 + $0x7b8] sm:$0xff]
        %v424 = vld [vmem:[%s147 + $0x7c0] sm:$0xff]
        %v425 = vld [vmem:[%s147 + $0x7c8] sm:$0xff]
        %v426 = vld [vmem:[%s147 + $0x7d0] sm:$0xff]
        %v427 = vld [vmem:[%s147 + $0x7d8] sm:$0xff]
        %v428 = vld [vmem:[%s147 + $0x7e0] sm:$0xff]
        %v429 = vld [vmem:[%s147 + $0x7e8] sm:$0xff]
        %v430 = vld [vmem:[%s147 + $0x7f0] sm:$0xff]
        %v431 = vld [vmem:[%s147 + $0x7f8] sm:$0xff]
        %v432 = vld [vmem:[#allocation2] sm:$0xff]
        %v433 = vld [vmem:[#allocation2 + $0x8] sm:$0xff]
        %v434 = vadd.f32 %v176, %v178
        %v435 = vadd.f32 %v434, %v180
        %v436 = vadd.f32 %v435, %v182
        %v437 = vadd.f32 %v436, %v184
        %v438 = vadd.f32 %v437, %v186
        %v439 = vadd.f32 %v438, %v188
        %v440 = vadd.f32 %v439, %v190
        %v441 = vadd.f32 %v440, %v192
        %v442 = vadd.f32 %v441, %v194
        %v443 = vadd.f32 %v442, %v196
        %v444 = vadd.f32 %v443, %v198
        %v445 = vadd.f32 %v444, %v200
        %v446 = vadd.f32 %v445, %v202
        %v447 = vadd.f32 %v446, %v204
        %v448 = vadd.f32 %v447, %v206
        %v449 = vrot.slane %v448, 4
        %v450 = vadd.f32 %v448, %v449
        %v451 = vrot.slane %v450, 2
        %v452 = vadd.f32 %v450, %v451
        %v453 = vrot.slane %v452, 1
        %v454 = vadd.f32 %v452, %v453
        %v455 = vadd.f32 %v177, %v179
        %v456 = vadd.f32 %v455, %v181
        %v457 = vadd.f32 %v456, %v183
        %v458 = vadd.f32 %v457, %v185
        %v459 = vadd.f32 %v458, %v187
        %v460 = vadd.f32 %v459, %v189
        %v461 = vadd.f32 %v460, %v191
        %v462 = vadd.f32 %v461, %v193
        %v463 = vadd.f32 %v462, %v195
        %v464 = vadd.f32 %v463, %v197
        %v465 = vadd.f32 %v464, %v199
        %v466 = vadd.f32 %v465, %v201
        %v467 = vadd.f32 %v466, %v203
        %v468 = vadd.f32 %v467, %v205
        %v469 = vadd.f32 %v468, %v207
        %v470 = vrot.slane %v469, 4
        %v471 = vadd.f32 %v469, %v470
        %v472 = vrot.slane %v471, 2
        %v473 = vadd.f32 %v471, %v472
        %v474 = vrot.slane %v473, 1
        %v475 = vadd.f32 %v473, %v474
        %v476 = vadd.f32 %v208, %v210
        %v477 = vadd.f32 %v476, %v212
        %v478 = vadd.f32 %v477, %v214
        %v479 = vadd.f32 %v478, %v216
        %v480 = vadd.f32 %v479, %v218
        %v481 = vadd.f32 %v480, %v220
        %v482 = vadd.f32 %v481, %v222
        %v483 = vadd.f32 %v482, %v224
        %v484 = vadd.f32 %v483, %v226
        %v485 = vadd.f32 %v484, %v228
        %v486 = vadd.f32 %v485, %v230
        %v487 = vadd.f32 %v486, %v232
        %v488 = vadd.f32 %v487, %v234
        %v489 = vadd.f32 %v488, %v236
        %v490 = vadd.f32 %v489, %v238
        %v491 = vrot.slane %v490, 4
        %v492 = vadd.f32 %v490, %v491
        %v493 = vrot.slane %v492, 2
        %v494 = vadd.f32 %v492, %v493
        %v495 = vrot.slane %v494, 1
        %v496 = vadd.f32 %v494, %v495
        %v497 = vadd.f32 %v209, %v211
        %v498 = vadd.f32 %v497, %v213
        %v499 = vadd.f32 %v498, %v215
        %v500 = vadd.f32 %v499, %v217
        %v501 = vadd.f32 %v500, %v219
        %v502 = vadd.f32 %v501, %v221
        %v503 = vadd.f32 %v502, %v223
        %v504 = vadd.f32 %v503, %v225
        %v505 = vadd.f32 %v504, %v227
        %v506 = vadd.f32 %v505, %v229
        %v507 = vadd.f32 %v506, %v231
        %v508 = vadd.f32 %v507, %v233
        %v509 = vadd.f32 %v508, %v235
        %v510 = vadd.f32 %v509, %v237
        %v511 = vadd.f32 %v510, %v239
        %v512 = vrot.slane %v511, 4
        %v513 = vadd.f32 %v511, %v512
        %v514 = vrot.slane %v513, 2
        %v515 = vadd.f32 %v513, %v514
        %v516 = vrot.slane %v515, 1
        %v517 = vadd.f32 %v515, %v516
        %v518 = vadd.f32 %v240, %v242
        %v519 = vadd.f32 %v518, %v244
        %v520 = vadd.f32 %v519, %v246
        %v521 = vadd.f32 %v520, %v248
        %v522 = vadd.f32 %v521, %v250
        %v523 = vadd.f32 %v522, %v252
        %v524 = vadd.f32 %v523, %v254
        %v525 = vadd.f32 %v524, %v256
        %v526 = vadd.f32 %v525, %v258
        %v527 = vadd.f32 %v526, %v260
        %v528 = vadd.f32 %v527, %v262
        %v529 = vadd.f32 %v528, %v264
        %v530 = vadd.f32 %v529, %v266
        %v531 = vadd.f32 %v530, %v268
        %v532 = vadd.f32 %v531, %v270
        %v533 = vrot.slane %v532, 4
        %v534 = vadd.f32 %v532, %v533
        %v535 = vrot.slane %v534, 2
        %v536 = vadd.f32 %v534, %v535
        %v537 = vrot.slane %v536, 1
        %v538 = vadd.f32 %v536, %v537
        %v539 = vadd.f32 %v241, %v243
        %v540 = vadd.f32 %v539, %v245
        %v541 = vadd.f32 %v540, %v247
        %v542 = vadd.f32 %v541, %v249
        %v543 = vadd.f32 %v542, %v251
        %v544 = vadd.f32 %v543, %v253
        %v545 = vadd.f32 %v544, %v255
        %v546 = vadd.f32 %v545, %v257
        %v547 = vadd.f32 %v546, %v259
        %v548 = vadd.f32 %v547, %v261
        %v549 = vadd.f32 %v548, %v263
        %v550 = vadd.f32 %v549, %v265
        %v551 = vadd.f32 %v550, %v267
        %v552 = vadd.f32 %v551, %v269
        %v553 = vadd.f32 %v552, %v271
        %v554 = vrot.slane %v553, 4
        %v555 = vadd.f32 %v553, %v554
        %v556 = vrot.slane %v555, 2
        %v557 = vadd.f32 %v555, %v556
        %v558 = vrot.slane %v557, 1
        %v559 = vadd.f32 %v557, %v558
        %v560 = vadd.f32 %v272, %v274
        %v561 = vadd.f32 %v560, %v276
        %v562 = vadd.f32 %v561, %v278
        %v563 = vadd.f32 %v562, %v280
        %v564 = vadd.f32 %v563, %v282
        %v565 = vadd.f32 %v564, %v284
        %v566 = vadd.f32 %v565, %v286
        %v567 = vadd.f32 %v566, %v288
        %v568 = vadd.f32 %v567, %v290
        %v569 = vadd.f32 %v568, %v292
        %v570 = vadd.f32 %v569, %v294
        %v571 = vadd.f32 %v570, %v296
        %v572 = vadd.f32 %v571, %v298
        %v573 = vadd.f32 %v572, %v300
        %v574 = vadd.f32 %v573, %v302
        %v575 = vrot.slane %v574, 4
        %v576 = vadd.f32 %v574, %v575
        %v577 = vrot.slane %v576, 2
        %v578 = vadd.f32 %v576, %v577
        %v579 = vrot.slane %v578, 1
        %v580 = vadd.f32 %v578, %v579
        %v581 = vadd.f32 %v273, %v275
        %v582 = vadd.f32 %v581, %v277
        %v583 = vadd.f32 %v582, %v279
        %v584 = vadd.f32 %v583, %v281
        %v585 = vadd.f32 %v584, %v283
        %v586 = vadd.f32 %v585, %v285
        %v587 = vadd.f32 %v586, %v287
        %v588 = vadd.f32 %v587, %v289
        %v589 = vadd.f32 %v588, %v291
        %v590 = vadd.f32 %v589, %v293
        %v591 = vadd.f32 %v590, %v295
        %v592 = vadd.f32 %v591, %v297
        %v593 = vadd.f32 %v592, %v299
        %v594 = vadd.f32 %v593, %v301
        %v595 = vadd.f32 %v594, %v303
        %v596 = vrot.slane %v595, 4
        %v597 = vadd.f32 %v595, %v596
        %v598 = vrot.slane %v597, 2
        %v599 = vadd.f32 %v597, %v598
        %v600 = vrot.slane %v599, 1
        %v601 = vadd.f32 %v599, %v600
        %v602 = vadd.f32 %v304, %v306
        %v603 = vadd.f32 %v602, %v308
        %v604 = vadd.f32 %v603, %v310
        %v605 = vadd.f32 %v604, %v312
        %v606 = vadd.f32 %v605, %v314
        %v607 = vadd.f32 %v606, %v316
        %v608 = vadd.f32 %v607, %v318
        %v609 = vadd.f32 %v608, %v320
        %v610 = vadd.f32 %v609, %v322
        %v611 = vadd.f32 %v610, %v324
        %v612 = vadd.f32 %v611, %v326
        %v613 = vadd.f32 %v612, %v328
        %v614 = vadd.f32 %v613, %v330
        %v615 = vadd.f32 %v614, %v332
        %v616 = vadd.f32 %v615, %v334
        %v617 = vrot.slane %v616, 4
        %v618 = vadd.f32 %v616, %v617
        %v619 = vrot.slane %v618, 2
        %v620 = vadd.f32 %v618, %v619
        %v621 = vrot.slane %v620, 1
        %v622 = vadd.f32 %v620, %v621
        %v623 = vadd.f32 %v305, %v307
        %v624 = vadd.f32 %v623, %v309
        %v625 = vadd.f32 %v624, %v311
        %v626 = vadd.f32 %v625, %v313
        %v627 = vadd.f32 %v626, %v315
        %v628 = vadd.f32 %v627, %v317
        %v629 = vadd.f32 %v628, %v319
        %v630 = vadd.f32 %v629, %v321
        %v631 = vadd.f32 %v630, %v323
        %v632 = vadd.f32 %v631, %v325
        %v633 = vadd.f32 %v632, %v327
        %v634 = vadd.f32 %v633, %v329
        %v635 = vadd.f32 %v634, %v331
        %v636 = vadd.f32 %v635, %v333
        %v637 = vadd.f32 %v636, %v335
        %v638 = vrot.slane %v637, 4
        %v639 = vadd.f32 %v637, %v638
        %v640 = vrot.slane %v639, 2
        %v641 = vadd.f32 %v639, %v640
        %v642 = vrot.slane %v641, 1
        %v643 = vadd.f32 %v641, %v642
        %v644 = vadd.f32 %v336, %v338
        %v645 = vadd.f32 %v644, %v340
        %v646 = vadd.f32 %v645, %v342
        %v647 = vadd.f32 %v646, %v344
        %v648 = vadd.f32 %v647, %v346
        %v649 = vadd.f32 %v648, %v348
        %v650 = vadd.f32 %v649, %v350
        %v651 = vadd.f32 %v650, %v352
        %v652 = vadd.f32 %v651, %v354
        %v653 = vadd.f32 %v652, %v356
        %v654 = vadd.f32 %v653, %v358
        %v655 = vadd.f32 %v654, %v360
        %v656 = vadd.f32 %v655, %v362
        %v657 = vadd.f32 %v656, %v364
        %v658 = vadd.f32 %v657, %v366
        %v659 = vrot.slane %v658, 4
        %v660 = vadd.f32 %v658, %v659
        %v661 = vrot.slane %v660, 2
        %v662 = vadd.f32 %v660, %v661
        %v663 = vrot.slane %v662, 1
        %v664 = vadd.f32 %v662, %v663
        %v665 = vadd.f32 %v337, %v339
        %v666 = vadd.f32 %v665, %v341
        %v667 = vadd.f32 %v666, %v343
        %v668 = vadd.f32 %v667, %v345
        %v669 = vadd.f32 %v668, %v347
        %v670 = vadd.f32 %v669, %v349
        %v671 = vadd.f32 %v670, %v351
        %v672 = vadd.f32 %v671, %v353
        %v673 = vadd.f32 %v672, %v355
        %v674 = vadd.f32 %v673, %v357
        %v675 = vadd.f32 %v674, %v359
        %v676 = vadd.f32 %v675, %v361
        %v677 = vadd.f32 %v676, %v363
        %v678 = vadd.f32 %v677, %v365
        %v679 = vadd.f32 %v678, %v367
        %v680 = vrot.slane %v679, 4
        %v681 = vadd.f32 %v679, %v680
        %v682 = vrot.slane %v681, 2
        %v683 = vadd.f32 %v681, %v682
        %v684 = vrot.slane %v683, 1
        %v685 = vadd.f32 %v683, %v684
        %v686 = vadd.f32 %v368, %v370
        %v687 = vadd.f32 %v686, %v372
        %v688 = vadd.f32 %v687, %v374
        %v689 = vadd.f32 %v688, %v376
        %v690 = vadd.f32 %v689, %v378
        %v691 = vadd.f32 %v690, %v380
        %v692 = vadd.f32 %v691, %v382
        %v693 = vadd.f32 %v692, %v384
        %v694 = vadd.f32 %v693, %v386
        %v695 = vadd.f32 %v694, %v388
        %v696 = vadd.f32 %v695, %v390
        %v697 = vadd.f32 %v696, %v392
        %v698 = vadd.f32 %v697, %v394
        %v699 = vadd.f32 %v698, %v396
        %v700 = vadd.f32 %v699, %v398
        %v701 = vrot.slane %v700, 4
        %v702 = vadd.f32 %v700, %v701
        %v703 = vrot.slane %v702, 2
        %v704 = vadd.f32 %v702, %v703
        %v705 = vrot.slane %v704, 1
        %v706 = vadd.f32 %v704, %v705
        %v707 = vadd.f32 %v369, %v371
        %v708 = vadd.f32 %v707, %v373
        %v709 = vadd.f32 %v708, %v375
        %v710 = vadd.f32 %v709, %v377
        %v711 = vadd.f32 %v710, %v379
        %v712 = vadd.f32 %v711, %v381
        %v713 = vadd.f32 %v712, %v383
        %v714 = vadd.f32 %v713, %v385
        %v715 = vadd.f32 %v714, %v387
        %v716 = vadd.f32 %v715, %v389
        %v717 = vadd.f32 %v716, %v391
        %v718 = vadd.f32 %v717, %v393
        %v719 = vadd.f32 %v718, %v395
        %v720 = vadd.f32 %v719, %v397
        %v721 = vadd.f32 %v720, %v399
        %v722 = vrot.slane %v721, 4
        %v723 = vadd.f32 %v721, %v722
        %v724 = vrot.slane %v723, 2
        %v725 = vadd.f32 %v723, %v724
        %v726 = vrot.slane %v725, 1
        %v727 = vadd.f32 %v725, %v726
        %v728 = vadd.f32 %v400, %v402
        %v729 = vadd.f32 %v728, %v404
        %v730 = vadd.f32 %v729, %v406
        %v731 = vadd.f32 %v730, %v408
        %v732 = vadd.f32 %v731, %v410
        %v733 = vadd.f32 %v732, %v412
        %v734 = vadd.f32 %v733, %v414
        %v735 = vadd.f32 %v734, %v416
        %v736 = vadd.f32 %v735, %v418
        %v737 = vadd.f32 %v736, %v420
        %v738 = vadd.f32 %v737, %v422
        %v739 = vadd.f32 %v738, %v424
        %v740 = vadd.f32 %v739, %v426
        %v741 = vadd.f32 %v740, %v428
        %v742 = vadd.f32 %v741, %v430
        %v743 = vrot.slane %v742, 4
        %v744 = vadd.f32 %v742, %v743
        %v745 = vrot.slane %v744, 2
        %v746 = vadd.f32 %v744, %v745
        %v747 = vrot.slane %v746, 1
        %v748 = vadd.f32 %v746, %v747
        %v749 = vadd.f32 %v401, %v403
        %v750 = vadd.f32 %v749, %v405
        %v751 = vadd.f32 %v750, %v407
        %v752 = vadd.f32 %v751, %v409
        %v753 = vadd.f32 %v752, %v411
        %v754 = vadd.f32 %v753, %v413
        %v755 = vadd.f32 %v754, %v415
        %v756 = vadd.f32 %v755, %v417
        %v757 = vadd.f32 %v756, %v419
        %v758 = vadd.f32 %v757, %v421
        %v759 = vadd.f32 %v758, %v423
        %v760 = vadd.f32 %v759, %v425
        %v761 = vadd.f32 %v760, %v427
        %v762 = vadd.f32 %v761, %v429
        %v763 = vadd.f32 %v762, %v431
        %v764 = vrot.slane %v763, 4
        %v765 = vadd.f32 %v763, %v764
        %v766 = vrot.slane %v765, 2
        %v767 = vadd.f32 %v765, %v766
        %v768 = vrot.slane %v767, 1
        %v769 = vadd.f32 %v767, %v768
        %vm786 = vcmask 1041409
        %v787 = vsel %vm786, %v496, %v454
        %vm788 = vcmask 1042434
        %v789 = vsel %vm788, %v538, %v787
        %vm790 = vcmask 1043459
        %v791 = vsel %vm790, %v580, %v789
        %vm792 = vcmask 1044484
        %v793 = vsel %vm792, %v622, %v791
        %vm794 = vcmask 1045509
        %v795 = vsel %vm794, %v664, %v793
        %vm796 = vcmask 1046534
        %v797 = vsel %vm796, %v706, %v795
        %vm798 = vcmask 1047559
        %v799 = vsel %vm798, %v748, %v797
        %v800 = vsel %vm786, %v517, %v475
        %v801 = vsel %vm788, %v559, %v800
        %v802 = vsel %vm790, %v601, %v801
        %v803 = vsel %vm792, %v643, %v802
        %v804 = vsel %vm794, %v685, %v803
        %v805 = vsel %vm796, %v727, %v804
        %v806 = vsel %vm798, %v769, %v805
        %v809 = vadd.f32 %v432, %v799
        %v810 = vadd.f32 %v433, %v806
        %811 = vst [vmem:[#allocation2] sm:$0xff] %v809
        %812 = vst [vmem:[#allocation2 + $0x8] sm:$0xff] %v810
        // Predicated region
        $region33: #{tpu_custom_call.1} parent=23 // pred_check
          %p813 = pneg %p170
        $region34: #{tpu_custom_call.1} parent=23 // pred_check_branch
          %815 = sbr.rel (%p813) target = $region36
        $region35: #{tpu_custom_call.1} parent=23 // pred_region
          %v816 = vld [vmem:[#allocation2] sm:$0xff]
          %v817 = vld [vmem:[#allocation2 + $0x8] sm:$0xff]
          %v818 = vmul.f32 %v816, 0.0078125
          %v819 = vmul.f32 %v817, 0.0078125
          %820 = vst [vmem:[%s165] sm:$0xff] %v818
          %821 = vst [vmem:[%s165 + $0x8] sm:$0xff] %v819
        $region36: #{tpu_custom_call.1} parent=23 // pred_fallthru
          _
        %s822 = sand.u32 %s77, 1
        %s823 = scalar_lea.sflag [#allocation5], %s822
        %s824 = sand.u32 %s77, 1
        %s825 = smul.addr %s824, 16
        %s826 = scalar_lea.vmem [#allocation6], %s825
        // Predicated region
        $region37: #{tpu_custom_call.1} parent=23 // pred_check
          %p827 = pneg %p87
        $region38: #{tpu_custom_call.1} parent=23 // pred_check_branch
          %829 = sbr.rel (%p827) target = $region40
        $region39: #{tpu_custom_call.1} parent=23 // pred_region
          %s830 = smul.u32 2, %s24
          %s832 = ssub.s32 256, 256
          %833 = vsyncadd %s823, %s832
          %s834 = smul.addr %s23, 2
          %s835 = sadd.s32 %s830, %s834
          %s836 = smul.addr %s835, 128
          %s837 = scalar_lea.hbm %s1, %s836
          %s839 = sshll.u32 %s826, 4
          %s840 = int_to_ptr.vmem [resolvable:$true] %s839
          %842 = dma.vmem_to_hbm [thread:$0]  %s840, 256, %s837, %s823
        $region40: #{tpu_custom_call.1} parent=23 // pred_fallthru
          _
      $region24: #{tpu_custom_call.1} parent=5 // pred_fallthru
        _
      %p843 = scmp.le.s32.totalorder 2, %s13
      // Predicated region
      $region41: #{tpu_custom_call.1} parent=5 // pred_check
        %p844 = pneg %p843
      $region42: #{tpu_custom_call.1} parent=5 // pred_check_branch
        %846 = sbr.rel (%p844) target = $region44
      $region43: #{tpu_custom_call.1} parent=5 // pred_region
        %s847 = ssub.s32 %s13, 2
        // Predicated region
        $region45: #{tpu_custom_call.1} parent=43 // pred_check
          %p848 = pneg %p93
        $region46: #{tpu_custom_call.1} parent=43 // pred_check_branch
          %850 = sbr.rel (%p848) target = $region48
        $region47: #{tpu_custom_call.1} parent=43 // pred_region
          %s851 = sand.u32 %s78, 1
          %s852 = scalar_lea.sflag [#allocation5], %s851
          %s853 = sand.u32 %s78, 1
          %s854 = smul.addr %s853, 16
          %s855 = scalar_lea.vmem [#allocation6], %s854
          %856 = dma.done %s852, 256
        $region48: #{tpu_custom_call.1} parent=43 // pred_fallthru
          _
      $region44: #{tpu_custom_call.1} parent=5 // pred_fallthru
        _
    $region6: #{tpu_custom_call.1} parent=1 // loop_footer
      %s17 = sadd.s32 1, %s13
    $region7: #{tpu_custom_call.1} parent=1 // loop_footer_branch
      %12 = sbr.rel target = $region3
    $region8: #{tpu_custom_call.1} parent=1 // loop_exit
      _
    %857 = vsyncpa [#allocation4], 1
    %s858 = scalar_lea.sflag [#allocation4], 1
    %859 = vsyncpa %s858, 1
    %860 = vsyncpa [#allocation5], 1
    %s861 = scalar_lea.sflag [#allocation5], 1
    %862 = vsyncpa %s861, 1

</llo_original>
